<compile_context>
chip_gen: v7x
topology: tpu7x:2x2x1
jax: 0.10.0
libtpu: 0.0.40
codegen_flags: <defaults>
</compile_context>

<pallas_src>
import functools

import jax
import jax.numpy as jnp
import numpy as np
from jax.experimental import pallas as pl
from jax.experimental.pallas import tpu as pltpu


def _round_up(a, b):
    return -(-a // b) * b


# ---------------------------------------------------------------------------
# Fused Pallas kernel: conv1(3x3, stride s) + ReLU + conv2(3x3, stride 1) + ReLU
# One image per grid step.  All operands are 2-D (channels, flat-spatial).
# ---------------------------------------------------------------------------
def _fused_unet_conv_kernel(x_ref, a1_ref, b1_ref, a2_ref, b2_ref, m1_ref,
                            out_ref, col1_ref, h_ref, col2_ref, *,
                            taps1, Wf, M, CinP, CmidP, Lh):
    """Refs:
      x_ref   : (1, P, CinP, Lp)   polyphase input planes, flat spatial on lanes
      a1_ref  : (CmidP, 9*CinP)    conv1 weights, tap-major
      b1_ref  : (CmidP, 1)         conv1 bias
      a2_ref  : (Cout, 9*CmidP)    conv2 weights, tap-major
      b2_ref  : (Cout, 1)          conv2 bias
      m1_ref  : (1, M)             1.0 on real columns, 0.0 on garbage columns
      out_ref : (1, Cout, M)       lane-dense extended output
      col1_ref: (9*CinP, M)        conv1 im2col staging (VMEM scratch)
      h_ref   : (CmidP, Lh)        conv1 output on zero-haloed flat grid (VMEM)
      col2_ref: (9*CmidP, M)       conv2 im2col staging (VMEM scratch)
    """
    # ---- conv1: stage the 9 shifted taps (aligned, full-sublane stores) ...
    for t, (p, s0) in enumerate(taps1):
        col1_ref[t * CinP:(t + 1) * CinP, :] = x_ref[0, p, :, s0:s0 + M]

    # ... then ONE MXU dot + bias + ReLU; garbage columns masked to zero so
    # they coincide with the zero border needed by conv2.
    h = jnp.dot(a1_ref[...], col1_ref[...], preferred_element_type=jnp.float32)
    h = jnp.maximum(h + b1_ref[...], 0.0) * m1_ref[...]

    # ---- intermediate -> zero-haloed flat scratch (never leaves VMEM).
    # Only the small halo margins are zeroed; re-doing it each step is
    # ~2*(Wf+1)*CmidP elements and keeps the kernel megacore-safe.
    h_ref[:, 0:Wf + 1] = jnp.zeros((CmidP, Wf + 1), jnp.float32)
    h_ref[:, Wf + 1 + M:Lh] = jnp.zeros((CmidP, Lh - (Wf + 1 + M)), jnp.float32)
    h_ref[:, Wf + 1:Wf + 1 + M] = h

    # ---- conv2: stage the 9 shifted taps from the haloed intermediate ...
    for t in range(9):
        s0 = (t // 3) * Wf + (t % 3)
        col2_ref[t * CmidP:(t + 1) * CmidP, :] = h_ref[:, s0:s0 + M]

    # ... ONE MXU dot + bias + ReLU; lane-dense (Cout, M) store.
    o = jnp.dot(a2_ref[...], col2_ref[...], preferred_element_type=jnp.float32)
    out_ref[0] = jnp.maximum(o + b2_ref[...], 0.0).astype(out_ref.dtype)


def _fused_unet_conv(planes, a1, b1, a2, b2, mask1, *, taps1, Wf, M, Lh):
    N, P, CinP, Lp = planes.shape
    CmidP = a1.shape[0]
    Cout = a2.shape[0]
    kernel = functools.partial(_fused_unet_conv_kernel, taps1=taps1, Wf=Wf,
                               M=M, CinP=CinP, CmidP=CmidP, Lh=Lh)
    return pl.pallas_call(
        kernel,
        out_shape=jax.ShapeDtypeStruct((N, Cout, M), jnp.float32),
        grid_spec=pltpu.PrefetchScalarGridSpec(
            num_scalar_prefetch=0,
            grid=(N,),                                       # one image / step
            in_specs=[
                pl.BlockSpec((1, P, CinP, Lp), lambda b: (b, 0, 0, 0)),
                pl.BlockSpec((CmidP, 9 * CinP), lambda b: (0, 0)),  # resident
                pl.BlockSpec((CmidP, 1), lambda b: (0, 0)),
                pl.BlockSpec((Cout, 9 * CmidP), lambda b: (0, 0)),  # resident
                pl.BlockSpec((Cout, 1), lambda b: (0, 0)),
                pl.BlockSpec((1, M), lambda b: (0, 0)),
            ],
            out_specs=pl.BlockSpec((1, Cout, M), lambda b: (b, 0, 0)),
            scratch_shapes=[
                pltpu.VMEM((9 * CinP, M), jnp.float32),      # conv1 im2col
                pltpu.VMEM((CmidP, Lh), jnp.float32),        # haloed interm.
                pltpu.VMEM((9 * CmidP, M), jnp.float32),     # conv2 im2col
            ]),
        compiler_params=pltpu.CompilerParams(
            dimension_semantics=("parallel",)),
    )(planes, a1, b1, a2, b2, mask1)


# ---------------------------------------------------------------------------
# Unet_conv forward (NCHW in / NCHW out, like the PyTorch module)
# ---------------------------------------------------------------------------
def unet_conv_forward(x_nchw, params, stride1):
    N, Cin, H, W = x_nchw.shape
    Cmid = params["w1"].shape[0]
    Cout = params["w2"].shape[0]
    s = stride1
    if s == 2:
        assert H % 2 == 0 and W % 2 == 0, "stride-2 path assumes even H, W"
        Ho, Wo = H // 2, W // 2
    else:
        Ho, Wo = H, W
    Wf = Wo + 2                    # flat-grid row width (conv2's padded width)
    M = Ho * Wf                    # extended (lane-dense) output length
    Lh = M + 2 * Wf + 2            # haloed intermediate length
    CinP = _round_up(Cin, 8)
    CmidP = _round_up(Cmid, 8)

    x = x_nchw.astype(jnp.float32)
    xc = jnp.pad(x, ((0, 0), (0, CinP - Cin), (0, 0), (0, 0)))   # channel pad
    if s == 1:
        # single plane = zero-padded image (+1 extra zero row as read margin)
        xp = jnp.pad(xc, ((0, 0), (0, 0), (1, 2), (1, 1)))       # (N,C,H+3,Wf)
        planes = xp[:, None]                                     # (N,1,C,H+3,Wf)
        taps1 = tuple((0, kh * Wf + kw)
                      for kh in range(3) for kw in range(3))
    else:
        # 4 polyphase planes (phase on a leading axis, never on lanes)
        xp = jnp.pad(xc, ((0, 0), (0, 0), (1, 1), (1, 1)))       # (N,C,H+2,W+2)
        xr = xp.reshape(N, CinP, Ho + 1, 2, Wo + 1, 2)
        planes = jnp.transpose(xr, (0, 3, 5, 1, 2, 4)).reshape(
            N, 4, CinP, Ho + 1, Wo + 1)
        planes = jnp.pad(planes, ((0, 0), (0, 0), (0, 0), (0, 1), (0, 1)))
        taps1 = tuple(((kh % 2) * 2 + (kw % 2), (kh // 2) * Wf + (kw // 2))
                      for kh in range(3) for kw in range(3))
    P = planes.shape[1]
    planes = planes.reshape(N, P, CinP, -1)                      # flat spatial

    # Weights (O, I, 3, 3) -> tap-major matrices (Opad, 9*Ipad), zero padded.
    def pack(w, o_pad, i_pad):
        O, I = w.shape[0], w.shape[1]
        wp = jnp.pad(w, ((0, o_pad - O), (0, i_pad - I), (0, 0), (0, 0)))
        return jnp.transpose(wp, (0, 2, 3, 1)).reshape(o_pad, 9 * i_pad)

    a1 = pack(params["w1"], CmidP, CinP).astype(jnp.float32)
    a2 = pack(params["w2"], Cout, CmidP).astype(jnp.float32)
    b1 = jnp.pad(params["b1"], (0, CmidP - Cmid)).reshape(CmidP, 1)
    b2 = params["b2"].reshape(Cout, 1)
    # zero out the 2 garbage columns per flat row of the conv1 output
    mask1 = ((jnp.arange(M) % Wf) < Wo).astype(jnp.float32).reshape(1, M)

    out_flat = _fused_unet_conv(planes, a1, b1, a2, b2, mask1,
                                taps1=taps1, Wf=Wf, M=M, Lh=Lh)
    # (N, Cout, Ho*Wf) -> drop the 2 garbage columns -> NCHW output directly
    return out_flat.reshape(N, Cout, Ho, Wf)[:, :, :, :Wo]


def init_unet_conv_params(key, in_channels, out_channels, mid_channels=None):
    """Deterministic xavier-uniform weights + small uniform biases (synthetic)."""
    stride = 1
    if mid_channels is None:
        mid_channels = out_channels
        stride = 2
    k1, k2, k3, k4 = jax.random.split(key, 4)

    def xavier(k, shape):  # shape = (O, I, KH, KW)
        fan_in = shape[1] * shape[2] * shape[3]
        fan_out = shape[0] * shape[2] * shape[3]
        limit = float(np.sqrt(6.0 / (fan_in + fan_out)))
        return jax.random.uniform(k, shape, jnp.float32, -limit, limit)

    params = {
        "w1": xavier(k1, (mid_channels, in_channels, 3, 3)),
        "b1": jax.random.uniform(k2, (mid_channels,), jnp.float32, -0.1, 0.1),
        "w2": xavier(k3, (out_channels, mid_channels, 3, 3)),
        "b2": jax.random.uniform(k4, (out_channels,), jnp.float32, -0.1, 0.1),
    }
    return params, stride


# ---------------------------------------------------------------------------
# Pure-JAX reference (lax conv) for the correctness check
# ---------------------------------------------------------------------------
def _ref_forward(x, params, stride1):
    def conv(x, w, b, s):
        y = jax.lax.conv_general_dilated(
            x, w, (s, s), ((1, 1), (1, 1)),
            dimension_numbers=("NCHW", "OIHW", "NCHW"))
        return jnp.maximum(y + b[None, :, None, None], 0.0)

    x = conv(x, params["w1"], params["b1"], stride1)
    x = conv(x, params["w2"], params["b2"], 1)
    return x


if __name__ == "__main__":
    key = jax.random.PRNGKey(0)
    k_x, k_p, k_p2 = jax.random.split(key, 3)

    N, Cin, H, W = 2, 4, 16, 16
    Cout = 8
    x = jax.random.normal(k_x, (N, Cin, H, W), dtype=jnp.float32)

    # Case 1: Unet_conv(4, 8) -> mid=8, conv1 stride=2 (default down path)
    params, s1 = init_unet_conv_params(k_p, Cin, Cout)
    fwd = jax.jit(functools.partial(unet_conv_forward, stride1=s1))
    out = jax.block_until_ready(fwd(x, params))
    ref = jax.block_until_ready(_ref_forward(x, params, s1))
    np.testing.assert_allclose(np.asarray(out), np.asarray(ref),
                               rtol=1e-5, atol=1e-5)
    assert out.shape == (N, Cout, H // 2, W // 2), out.shape

    # Case 2: Unet_conv(4, 8, mid_channels=6) -> conv1 stride=1
    params2, s2 = init_unet_conv_params(k_p2, Cin, Cout, mid_channels=6)
    fwd2 = jax.jit(functools.partial(unet_conv_forward, stride1=s2))
    out2 = jax.block_until_ready(fwd2(x, params2))
    ref2 = jax.block_until_ready(_ref_forward(x, params2, s2))
    np.testing.assert_allclose(np.asarray(out2), np.asarray(ref2),
                               rtol=1e-5, atol=1e-5)
    assert out2.shape == (N, Cout, H, W), out2.shape

    print("KERNEL_OK")
</pallas_src>

<mosaic_0001>
module attributes {stable_mosaic.version = 11 : i64} {
  func.func @_fused_unet_conv_kernel(%arg0: i32, %arg1: memref<1x4x8x100xf32, #tpu.memory_space<vmem>>, %arg2: memref<8x72xf32, #tpu.memory_space<vmem>>, %arg3: memref<8x1xf32, #tpu.memory_space<vmem>>, %arg4: memref<8x72xf32, #tpu.memory_space<vmem>>, %arg5: memref<8x1xf32, #tpu.memory_space<vmem>>, %arg6: memref<1x80xf32, #tpu.memory_space<vmem>>, %arg7: memref<1x8x80xf32, #tpu.memory_space<vmem>>, %arg8: memref<72x80xf32, #tpu.memory_space<vmem>>, %arg9: memref<8x102xf32, #tpu.memory_space<vmem>>, %arg10: memref<72x80xf32, #tpu.memory_space<vmem>>) attributes {dimension_semantics = [#tpu.dimension_semantics<parallel>], iteration_bounds = array<i64: 2>, scalar_prefetch = 0 : i64, scratch_operands = 3 : i64, tpu.core_type = #tpu.core_type<tc>, window_params = [{transform_indices = @transform_0, window_bounds = array<i64: 1, 4, 8, 100>}, {pipeline_mode = #tpu.pipeline_mode<synchronous>, transform_indices = @transform_1, window_bounds = array<i64: 8, 72>}, {pipeline_mode = #tpu.pipeline_mode<synchronous>, transform_indices = @transform_2, window_bounds = array<i64: 8, 1>}, {pipeline_mode = #tpu.pipeline_mode<synchronous>, transform_indices = @transform_3, window_bounds = array<i64: 8, 72>}, {pipeline_mode = #tpu.pipeline_mode<synchronous>, transform_indices = @transform_4, window_bounds = array<i64: 8, 1>}, {pipeline_mode = #tpu.pipeline_mode<synchronous>, transform_indices = @transform_5, window_bounds = array<i64: 1, 80>}, {transform_indices = @transform_6, window_bounds = array<i64: 1, 8, 80>}]} {
    %c0 = arith.constant 0 : index
    %c0_0 = arith.constant 0 : index
    %c0_1 = arith.constant 0 : index
    %c0_2 = arith.constant 0 : index
    %0 = vector.load %arg1[%c0, %c0_0, %c0_1, %c0_2] : memref<1x4x8x100xf32, #tpu.memory_space<vmem>>, vector<1x1x8x80xf32>
    %1 = vector.shape_cast %0 : vector<1x1x8x80xf32> to vector<8x80xf32>
    %c0_3 = arith.constant 0 : index
    %c0_4 = arith.constant 0 : index
    %2 = vector.load %arg8[%c0_3, %c0_4] : memref<72x80xf32, #tpu.memory_space<vmem>>, vector<8x80xf32>
    tpu.vector_store %arg8[%c0_3, %c0_4], %1 {strides = array<i32>} : memref<72x80xf32, #tpu.memory_space<vmem>>, vector<8x80xf32>,
    %c0_5 = arith.constant 0 : index
    %c1 = arith.constant 1 : index
    %c0_6 = arith.constant 0 : index
    %c0_7 = arith.constant 0 : index
    %3 = vector.load %arg1[%c0_5, %c1, %c0_6, %c0_7] : memref<1x4x8x100xf32, #tpu.memory_space<vmem>>, vector<1x1x8x80xf32>
    %4 = vector.shape_cast %3 : vector<1x1x8x80xf32> to vector<8x80xf32>
    %c8 = arith.constant 8 : index
    %c0_8 = arith.constant 0 : index
    %5 = vector.load %arg8[%c8, %c0_8] : memref<72x80xf32, #tpu.memory_space<vmem>>, vector<8x80xf32>
    tpu.vector_store %arg8[%c8, %c0_8], %4 {strides = array<i32>} : memref<72x80xf32, #tpu.memory_space<vmem>>, vector<8x80xf32>,
    %c0_9 = arith.constant 0 : index
    %c0_10 = arith.constant 0 : index
    %c0_11 = arith.constant 0 : index
    %c1_12 = arith.constant 1 : index
    %6 = vector.load %arg1[%c0_9, %c0_10, %c0_11, %c1_12] : memref<1x4x8x100xf32, #tpu.memory_space<vmem>>, vector<1x1x8x80xf32>
    %7 = vector.shape_cast %6 : vector<1x1x8x80xf32> to vector<8x80xf32>
    %c16 = arith.constant 16 : index
    %c0_13 = arith.constant 0 : index
    %8 = vector.load %arg8[%c16, %c0_13] : memref<72x80xf32, #tpu.memory_space<vmem>>, vector<8x80xf32>
    tpu.vector_store %arg8[%c16, %c0_13], %7 {strides = array<i32>} : memref<72x80xf32, #tpu.memory_space<vmem>>, vector<8x80xf32>,
    %c0_14 = arith.constant 0 : index
    %c2 = arith.constant 2 : index
    %c0_15 = arith.constant 0 : index
    %c0_16 = arith.constant 0 : index
    %9 = vector.load %arg1[%c0_14, %c2, %c0_15, %c0_16] : memref<1x4x8x100xf32, #tpu.memory_space<vmem>>, vector<1x1x8x80xf32>
    %10 = vector.shape_cast %9 : vector<1x1x8x80xf32> to vector<8x80xf32>
    %c24 = arith.constant 24 : index
    %c0_17 = arith.constant 0 : index
    %11 = vector.load %arg8[%c24, %c0_17] : memref<72x80xf32, #tpu.memory_space<vmem>>, vector<8x80xf32>
    tpu.vector_store %arg8[%c24, %c0_17], %10 {strides = array<i32>} : memref<72x80xf32, #tpu.memory_space<vmem>>, vector<8x80xf32>,
    %c0_18 = arith.constant 0 : index
    %c3 = arith.constant 3 : index
    %c0_19 = arith.constant 0 : index
    %c0_20 = arith.constant 0 : index
    %12 = vector.load %arg1[%c0_18, %c3, %c0_19, %c0_20] : memref<1x4x8x100xf32, #tpu.memory_space<vmem>>, vector<1x1x8x80xf32>
    %13 = vector.shape_cast %12 : vector<1x1x8x80xf32> to vector<8x80xf32>
    %c32 = arith.constant 32 : index
    %c0_21 = arith.constant 0 : index
    %14 = vector.load %arg8[%c32, %c0_21] : memref<72x80xf32, #tpu.memory_space<vmem>>, vector<8x80xf32>
    tpu.vector_store %arg8[%c32, %c0_21], %13 {strides = array<i32>} : memref<72x80xf32, #tpu.memory_space<vmem>>, vector<8x80xf32>,
    %c0_22 = arith.constant 0 : index
    %c2_23 = arith.constant 2 : index
    %c0_24 = arith.constant 0 : index
    %c1_25 = arith.constant 1 : index
    %15 = vector.load %arg1[%c0_22, %c2_23, %c0_24, %c1_25] : memref<1x4x8x100xf32, #tpu.memory_space<vmem>>, vector<1x1x8x80xf32>
    %16 = vector.shape_cast %15 : vector<1x1x8x80xf32> to vector<8x80xf32>
    %c40 = arith.constant 40 : index
    %c0_26 = arith.constant 0 : index
    %17 = vector.load %arg8[%c40, %c0_26] : memref<72x80xf32, #tpu.memory_space<vmem>>, vector<8x80xf32>
    tpu.vector_store %arg8[%c40, %c0_26], %16 {strides = array<i32>} : memref<72x80xf32, #tpu.memory_space<vmem>>, vector<8x80xf32>,
    %c0_27 = arith.constant 0 : index
    %c0_28 = arith.constant 0 : index
    %c0_29 = arith.constant 0 : index
    %c10 = arith.constant 10 : index
    %18 = vector.load %arg1[%c0_27, %c0_28, %c0_29, %c10] : memref<1x4x8x100xf32, #tpu.memory_space<vmem>>, vector<1x1x8x80xf32>
    %19 = vector.shape_cast %18 : vector<1x1x8x80xf32> to vector<8x80xf32>
    %c48 = arith.constant 48 : index
    %c0_30 = arith.constant 0 : index
    %20 = vector.load %arg8[%c48, %c0_30] : memref<72x80xf32, #tpu.memory_space<vmem>>, vector<8x80xf32>
    tpu.vector_store %arg8[%c48, %c0_30], %19 {strides = array<i32>} : memref<72x80xf32, #tpu.memory_space<vmem>>, vector<8x80xf32>,
    %c0_31 = arith.constant 0 : index
    %c1_32 = arith.constant 1 : index
    %c0_33 = arith.constant 0 : index
    %c10_34 = arith.constant 10 : index
    %21 = vector.load %arg1[%c0_31, %c1_32, %c0_33, %c10_34] : memref<1x4x8x100xf32, #tpu.memory_space<vmem>>, vector<1x1x8x80xf32>
    %22 = vector.shape_cast %21 : vector<1x1x8x80xf32> to vector<8x80xf32>
    %c56 = arith.constant 56 : index
    %c0_35 = arith.constant 0 : index
    %23 = vector.load %arg8[%c56, %c0_35] : memref<72x80xf32, #tpu.memory_space<vmem>>, vector<8x80xf32>
    tpu.vector_store %arg8[%c56, %c0_35], %22 {strides = array<i32>} : memref<72x80xf32, #tpu.memory_space<vmem>>, vector<8x80xf32>,
    %c0_36 = arith.constant 0 : index
    %c0_37 = arith.constant 0 : index
    %c0_38 = arith.constant 0 : index
    %c11 = arith.constant 11 : index
    %24 = vector.load %arg1[%c0_36, %c0_37, %c0_38, %c11] : memref<1x4x8x100xf32, #tpu.memory_space<vmem>>, vector<1x1x8x80xf32>
    %25 = vector.shape_cast %24 : vector<1x1x8x80xf32> to vector<8x80xf32>
    %c64 = arith.constant 64 : index
    %c0_39 = arith.constant 0 : index
    %26 = vector.load %arg8[%c64, %c0_39] : memref<72x80xf32, #tpu.memory_space<vmem>>, vector<8x80xf32>
    tpu.vector_store %arg8[%c64, %c0_39], %25 {strides = array<i32>} : memref<72x80xf32, #tpu.memory_space<vmem>>, vector<8x80xf32>,
    %c0_40 = arith.constant 0 : index
    %c0_41 = arith.constant 0 : index
    %27 = vector.load %arg2[%c0_40, %c0_41] : memref<8x72xf32, #tpu.memory_space<vmem>>, vector<8x72xf32>
    %c0_42 = arith.constant 0 : index
    %c0_43 = arith.constant 0 : index
    %28 = vector.load %arg8[%c0_42, %c0_43] : memref<72x80xf32, #tpu.memory_space<vmem>>, vector<72x80xf32>
    %cst = arith.constant dense<0.000000e+00> : vector<8x80xf32>
    %29 = tpu.matmul %27, %28, %cst {dimension_numbers = #tpu.dot_dimension_numbers<[1], [0], [0], [1], [0, 0, 1, 1], [], []>} : vector<8x72xf32>, vector<72x80xf32>, vector<8x80xf32> -> vector<8x80xf32>
    %c0_44 = arith.constant 0 : index
    %c0_45 = arith.constant 0 : index
    %30 = vector.load %arg3[%c0_44, %c0_45] : memref<8x1xf32, #tpu.memory_space<vmem>>, vector<8x1xf32>
    %31 = vector.broadcast %30 : vector<8x1xf32> to vector<8x80xf32>
    %32 = arith.addf %29, %31 : vector<8x80xf32>
    %cst_46 = arith.constant 0.000000e+00 : f32
    %33 = vector.broadcast %cst_46 : f32 to vector<8x80xf32>
    %34 = arith.maximumf %32, %33 : vector<8x80xf32>
    %c0_47 = arith.constant 0 : index
    %c0_48 = arith.constant 0 : index
    %35 = vector.load %arg6[%c0_47, %c0_48] : memref<1x80xf32, #tpu.memory_space<vmem>>, vector<1x80xf32>
    %36 = vector.broadcast %35 : vector<1x80xf32> to vector<8x80xf32>
    %37 = arith.mulf %34, %36 : vector<8x80xf32>
    %cst_49 = arith.constant 0.000000e+00 : f32
    %38 = vector.broadcast %cst_49 : f32 to vector<8x11xf32>
    %c0_50 = arith.constant 0 : index
    %c0_51 = arith.constant 0 : index
    %39 = vector.load %arg9[%c0_50, %c0_51] : memref<8x102xf32, #tpu.memory_space<vmem>>, vector<8x11xf32>
    tpu.vector_store %arg9[%c0_50, %c0_51], %38 {strides = array<i32>} : memref<8x102xf32, #tpu.memory_space<vmem>>, vector<8x11xf32>,
    %cst_52 = arith.constant 0.000000e+00 : f32
    %40 = vector.broadcast %cst_52 : f32 to vector<8x11xf32>
    %c0_53 = arith.constant 0 : index
    %c91 = arith.constant 91 : index
    %41 = vector.load %arg9[%c0_53, %c91] : memref<8x102xf32, #tpu.memory_space<vmem>>, vector<8x11xf32>
    tpu.vector_store %arg9[%c0_53, %c91], %40 {strides = array<i32>} : memref<8x102xf32, #tpu.memory_space<vmem>>, vector<8x11xf32>,
    %c0_54 = arith.constant 0 : index
    %c11_55 = arith.constant 11 : index
    %42 = vector.load %arg9[%c0_54, %c11_55] : memref<8x102xf32, #tpu.memory_space<vmem>>, vector<8x80xf32>
    tpu.vector_store %arg9[%c0_54, %c11_55], %37 {strides = array<i32>} : memref<8x102xf32, #tpu.memory_space<vmem>>, vector<8x80xf32>,
    %c0_56 = arith.constant 0 : index
    %c0_57 = arith.constant 0 : index
    %43 = vector.load %arg9[%c0_56, %c0_57] : memref<8x102xf32, #tpu.memory_space<vmem>>, vector<8x80xf32>
    %c0_58 = arith.constant 0 : index
    %c0_59 = arith.constant 0 : index
    %44 = vector.load %arg10[%c0_58, %c0_59] : memref<72x80xf32, #tpu.memory_space<vmem>>, vector<8x80xf32>
    tpu.vector_store %arg10[%c0_58, %c0_59], %43 {strides = array<i32>} : memref<72x80xf32, #tpu.memory_space<vmem>>, vector<8x80xf32>,
    %c0_60 = arith.constant 0 : index
    %c1_61 = arith.constant 1 : index
    %45 = vector.load %arg9[%c0_60, %c1_61] : memref<8x102xf32, #tpu.memory_space<vmem>>, vector<8x80xf32>
    %c8_62 = arith.constant 8 : index
    %c0_63 = arith.constant 0 : index
    %46 = vector.load %arg10[%c8_62, %c0_63] : memref<72x80xf32, #tpu.memory_space<vmem>>, vector<8x80xf32>
    tpu.vector_store %arg10[%c8_62, %c0_63], %45 {strides = array<i32>} : memref<72x80xf32, #tpu.memory_space<vmem>>, vector<8x80xf32>,
    %c0_64 = arith.constant 0 : index
    %c2_65 = arith.constant 2 : index
    %47 = vector.load %arg9[%c0_64, %c2_65] : memref<8x102xf32, #tpu.memory_space<vmem>>, vector<8x80xf32>
    %c16_66 = arith.constant 16 : index
    %c0_67 = arith.constant 0 : index
    %48 = vector.load %arg10[%c16_66, %c0_67] : memref<72x80xf32, #tpu.memory_space<vmem>>, vector<8x80xf32>
    tpu.vector_store %arg10[%c16_66, %c0_67], %47 {strides = array<i32>} : memref<72x80xf32, #tpu.memory_space<vmem>>, vector<8x80xf32>,
    %c0_68 = arith.constant 0 : index
    %c10_69 = arith.constant 10 : index
    %49 = vector.load %arg9[%c0_68, %c10_69] : memref<8x102xf32, #tpu.memory_space<vmem>>, vector<8x80xf32>
    %c24_70 = arith.constant 24 : index
    %c0_71 = arith.constant 0 : index
    %50 = vector.load %arg10[%c24_70, %c0_71] : memref<72x80xf32, #tpu.memory_space<vmem>>, vector<8x80xf32>
    tpu.vector_store %arg10[%c24_70, %c0_71], %49 {strides = array<i32>} : memref<72x80xf32, #tpu.memory_space<vmem>>, vector<8x80xf32>,
    %c0_72 = arith.constant 0 : index
    %c11_73 = arith.constant 11 : index
    %51 = vector.load %arg9[%c0_72, %c11_73] : memref<8x102xf32, #tpu.memory_space<vmem>>, vector<8x80xf32>
    %c32_74 = arith.constant 32 : index
    %c0_75 = arith.constant 0 : index
    %52 = vector.load %arg10[%c32_74, %c0_75] : memref<72x80xf32, #tpu.memory_space<vmem>>, vector<8x80xf32>
    tpu.vector_store %arg10[%c32_74, %c0_75], %51 {strides = array<i32>} : memref<72x80xf32, #tpu.memory_space<vmem>>, vector<8x80xf32>,
    %c0_76 = arith.constant 0 : index
    %c12 = arith.constant 12 : index
    %53 = vector.load %arg9[%c0_76, %c12] : memref<8x102xf32, #tpu.memory_space<vmem>>, vector<8x80xf32>
    %c40_77 = arith.constant 40 : index
    %c0_78 = arith.constant 0 : index
    %54 = vector.load %arg10[%c40_77, %c0_78] : memref<72x80xf32, #tpu.memory_space<vmem>>, vector<8x80xf32>
    tpu.vector_store %arg10[%c40_77, %c0_78], %53 {strides = array<i32>} : memref<72x80xf32, #tpu.memory_space<vmem>>, vector<8x80xf32>,
    %c0_79 = arith.constant 0 : index
    %c20 = arith.constant 20 : index
    %55 = vector.load %arg9[%c0_79, %c20] : memref<8x102xf32, #tpu.memory_space<vmem>>, vector<8x80xf32>
    %c48_80 = arith.constant 48 : index
    %c0_81 = arith.constant 0 : index
    %56 = vector.load %arg10[%c48_80, %c0_81] : memref<72x80xf32, #tpu.memory_space<vmem>>, vector<8x80xf32>
    tpu.vector_store %arg10[%c48_80, %c0_81], %55 {strides = array<i32>} : memref<72x80xf32, #tpu.memory_space<vmem>>, vector<8x80xf32>,
    %c0_82 = arith.constant 0 : index
    %c21 = arith.constant 21 : index
    %57 = vector.load %arg9[%c0_82, %c21] : memref<8x102xf32, #tpu.memory_space<vmem>>, vector<8x80xf32>
    %c56_83 = arith.constant 56 : index
    %c0_84 = arith.constant 0 : index
    %58 = vector.load %arg10[%c56_83, %c0_84] : memref<72x80xf32, #tpu.memory_space<vmem>>, vector<8x80xf32>
    tpu.vector_store %arg10[%c56_83, %c0_84], %57 {strides = array<i32>} : memref<72x80xf32, #tpu.memory_space<vmem>>, vector<8x80xf32>,
    %c0_85 = arith.constant 0 : index
    %c22 = arith.constant 22 : index
    %59 = vector.load %arg9[%c0_85, %c22] : memref<8x102xf32, #tpu.memory_space<vmem>>, vector<8x80xf32>
    %c64_86 = arith.constant 64 : index
    %c0_87 = arith.constant 0 : index
    %60 = vector.load %arg10[%c64_86, %c0_87] : memref<72x80xf32, #tpu.memory_space<vmem>>, vector<8x80xf32>
    tpu.vector_store %arg10[%c64_86, %c0_87], %59 {strides = array<i32>} : memref<72x80xf32, #tpu.memory_space<vmem>>, vector<8x80xf32>,
    %c0_88 = arith.constant 0 : index
    %c0_89 = arith.constant 0 : index
    %61 = vector.load %arg4[%c0_88, %c0_89] : memref<8x72xf32, #tpu.memory_space<vmem>>, vector<8x72xf32>
    %c0_90 = arith.constant 0 : index
    %c0_91 = arith.constant 0 : index
    %62 = vector.load %arg10[%c0_90, %c0_91] : memref<72x80xf32, #tpu.memory_space<vmem>>, vector<72x80xf32>
    %cst_92 = arith.constant dense<0.000000e+00> : vector<8x80xf32>
    %63 = tpu.matmul %61, %62, %cst_92 {dimension_numbers = #tpu.dot_dimension_numbers<[1], [0], [0], [1], [0, 0, 1, 1], [], []>} : vector<8x72xf32>, vector<72x80xf32>, vector<8x80xf32> -> vector<8x80xf32>
    %c0_93 = arith.constant 0 : index
    %c0_94 = arith.constant 0 : index
    %64 = vector.load %arg5[%c0_93, %c0_94] : memref<8x1xf32, #tpu.memory_space<vmem>>, vector<8x1xf32>
    %65 = vector.broadcast %64 : vector<8x1xf32> to vector<8x80xf32>
    %66 = arith.addf %63, %65 : vector<8x80xf32>
    %cst_95 = arith.constant 0.000000e+00 : f32
    %67 = vector.broadcast %cst_95 : f32 to vector<8x80xf32>
    %68 = arith.maximumf %66, %67 : vector<8x80xf32>
    %c0_96 = arith.constant 0 : index
    %c0_97 = arith.constant 0 : index
    %c0_98 = arith.constant 0 : index
    %69 = vector.load %arg7[%c0_96, %c0_97, %c0_98] : memref<1x8x80xf32, #tpu.memory_space<vmem>>, vector<1x8x80xf32>
    %70 = vector.shape_cast %69 : vector<1x8x80xf32> to vector<8x80xf32>
    %71 = vector.shape_cast %68 : vector<8x80xf32> to vector<1x8x80xf32>
    tpu.vector_store %arg7[%c0_96, %c0_97, %c0_98], %71 {strides = array<i32>} : memref<1x8x80xf32, #tpu.memory_space<vmem>>, vector<1x8x80xf32>,
    return
  }
  func.func @transform_0(%arg0: i32) -> (i32, i32, i32, i32) {
    %c0_i32 = arith.constant 0 : i32
    %c0_i32_0 = arith.constant 0 : i32
    %c0_i32_1 = arith.constant 0 : i32
    %c0_i32_2 = arith.constant 0 : i32
    return %arg0, %c0_i32, %c0_i32_0, %c0_i32_1 : i32, i32, i32, i32
  }
  func.func @transform_1(%arg0: i32) -> (i32, i32) {
    %c0_i32 = arith.constant 0 : i32
    %c0_i32_0 = arith.constant 0 : i32
    %c0_i32_1 = arith.constant 0 : i32
    return %c0_i32, %c0_i32_0 : i32, i32
  }
  func.func @transform_2(%arg0: i32) -> (i32, i32) {
    %c0_i32 = arith.constant 0 : i32
    %c0_i32_0 = arith.constant 0 : i32
    %c0_i32_1 = arith.constant 0 : i32
    return %c0_i32, %c0_i32_0 : i32, i32
  }
  func.func @transform_3(%arg0: i32) -> (i32, i32) {
    %c0_i32 = arith.constant 0 : i32
    %c0_i32_0 = arith.constant 0 : i32
    %c0_i32_1 = arith.constant 0 : i32
    return %c0_i32, %c0_i32_0 : i32, i32
  }
  func.func @transform_4(%arg0: i32) -> (i32, i32) {
    %c0_i32 = arith.constant 0 : i32
    %c0_i32_0 = arith.constant 0 : i32
    %c0_i32_1 = arith.constant 0 : i32
    return %c0_i32, %c0_i32_0 : i32, i32
  }
  func.func @transform_5(%arg0: i32) -> (i32, i32) {
    %c0_i32 = arith.constant 0 : i32
    %c0_i32_0 = arith.constant 0 : i32
    %c0_i32_1 = arith.constant 0 : i32
    return %c0_i32, %c0_i32_0 : i32, i32
  }
  func.func @transform_6(%arg0: i32) -> (i32, i32, i32) {
    %c0_i32 = arith.constant 0 : i32
    %c0_i32_0 = arith.constant 0 : i32
    %c0_i32_1 = arith.constant 0 : i32
    return %arg0, %c0_i32, %c0_i32_0 : i32, i32, i32
  }
}

</mosaic_0001>

<llo_original>
// kernel: unet_conv_forward.1
$region0: #{unet_conv_forward.1}
  #allocation0 [shape = 'u32[]', space=smem, size = 0x4, offset = 0x4, fixed_abs, tag = 'smem constant byte address 0x4 - core index']
  #allocation1 [shape = 'u32[144,128]{1,0:T(1,128)}', space=vmem, size = 0x12000, scoped, tag = 'internal scratch']
  #allocation2 [shape = 'f32[72,80]{1,0:T(8,128)}', space=vmem, size = 0x9000, scoped, tag = 'scratch operand']
  #allocation3 [shape = 'f32[8,102]{1,0:T(8,128)}', space=vmem, size = 0x1000, scoped, tag = 'scratch operand']
  #allocation4 [shape = 'f32[72,80]{1,0:T(8,128)}', space=vmem, size = 0x9000, scoped, tag = 'scratch operand']
  %s0 = inlined_call_operand.vmem [shape: f32[2,4,8,100], index: 0, kind: input, shape index: {}]
  %s1 = inlined_call_operand.vmem [shape: f32[8,72], index: 1, kind: input, shape index: {}]
  %s2 = inlined_call_operand.vmem [shape: f32[8,1], index: 2, kind: input, shape index: {}]
  %s3 = inlined_call_operand.vmem [shape: f32[8,72], index: 3, kind: input, shape index: {}]
  %s4 = inlined_call_operand.vmem [shape: f32[8,1], index: 4, kind: input, shape index: {}]
  %s5 = inlined_call_operand.vmem [shape: f32[1,80], index: 5, kind: input, shape index: {}]
  %s6 = inlined_call_operand.vmem [shape: f32[2,8,80], index: 6, kind: output, shape index: {}]
  %s7 = sld [smem:[#allocation0]]
  $region57: #{unet_conv_forward.1} parent=0
    _
  %s9 = ssub.s32 1, %s7
  %s10 = scalar_select 0, %s9, %s7
  loop: start=0, step=1, limit=4
  $region2: #{unet_conv_forward.1} parent=0 // loop_pre_header
    _
  $region3: #{unet_conv_forward.1} parent=0 // loop_header
    %s12 = sphi 0, %s16
    %p13 = scmp.ge.s32.totalorder %s12, 4
    %s22 = sphi 0, %s24
    %s25 = sphi 0, %s22
    %s26 = sphi 0, %s25
    %s42 = sphi 0, %s26
    %s46 = sphi 0, %s46
    %s48 = sphi 0, %s46
    %s49 = sphi 0, %s48
    %s63 = sphi 0, %s49
    %s67 = sphi 0, %s67
    %s69 = sphi 0, %s67
    %s70 = sphi 0, %s69
    %s84 = sphi 0, %s70
    %s88 = sphi 0, %s88
    %s90 = sphi 0, %s88
    %s91 = sphi 0, %s90
    %s105 = sphi 0, %s91
    %s109 = sphi 0, %s109
    %s111 = sphi 0, %s109
    %s112 = sphi 0, %s111
    %s126 = sphi 0, %s112
    %s130 = sphi 0, %s130
    %s132 = sphi 0, %s130
    %s133 = sphi 0, %s132
    %s147 = sphi 0, %s133
    %s153 = sphi 0, %s155
    %s156 = sphi 0, %s153
    %s157 = sphi 0, %s156
    %s173 = sphi 0, %s157
  $region4: #{unet_conv_forward.1} parent=0 // loop_header_branch
    %15 = sbr.rel (%p13) target = $region8
  $region5: #{unet_conv_forward.1} parent=0 // loop_body
    %s17 = ssub.s32 %s12, 1
    %s18 = ssub.s32 %s12, 2
    %s19 = sadd.s32 %s12, 1
    %s20 = ssub.s32 %s12, %s19
    %p21 = scmp.eq.s32.totalorder %s20, 0
    %s23 = sadd.s32 %s22, 1
    %s24 = scalar_select %p21, %s22, %s23
    %p27 = pneg %p21
    %p28 = scmp.eq.s32.totalorder %s12, 1
    %p29 = por %p27, %p28
    %p30 = scmp.ne.s32.totalorder %s22, %s25
    %p31 = scmp.eq.s32.totalorder %s12, 0
    %p32 = por %p30, %p31
    %p33 = scmp.ne.s32.totalorder %s22, %s25
    %p34 = scmp.eq.s32.totalorder %s17, 1
    %p35 = por %p33, %p34
    %p36 = scmp.ne.s32.totalorder %s25, %s26
    %p37 = scmp.eq.s32.totalorder %s17, 0
    %p38 = por %p36, %p37
    %p39 = scmp.ne.s32.totalorder %s25, %s26
    %p40 = scmp.eq.s32.totalorder %s18, 1
    %p41 = por %p39, %p40
    %p43 = scmp.ne.s32.totalorder %s26, %s42
    %p44 = scmp.eq.s32.totalorder %s18, 0
    %p45 = por %p43, %p44
    %s47 = sadd.s32 %s46, 1
    %p50 = scmp.eq.s32.totalorder %s12, 1
    %p51 = scmp.ne.s32.totalorder %s46, %s48
    %p52 = scmp.eq.s32.totalorder %s12, 0
    %p53 = por %p51, %p52
    %p54 = scmp.ne.s32.totalorder %s46, %s48
    %p55 = scmp.eq.s32.totalorder %s17, 1
    %p56 = por %p54, %p55
    %p57 = scmp.ne.s32.totalorder %s48, %s49
    %p58 = scmp.eq.s32.totalorder %s17, 0
    %p59 = por %p57, %p58
    %p60 = scmp.ne.s32.totalorder %s48, %s49
    %p61 = scmp.eq.s32.totalorder %s18, 1
    %p62 = por %p60, %p61
    %p64 = scmp.ne.s32.totalorder %s49, %s63
    %p65 = scmp.eq.s32.totalorder %s18, 0
    %p66 = por %p64, %p65
    %s68 = sadd.s32 %s67, 1
    %p71 = scmp.eq.s32.totalorder %s12, 1
    %p72 = scmp.ne.s32.totalorder %s67, %s69
    %p73 = scmp.eq.s32.totalorder %s12, 0
    %p74 = por %p72, %p73
    %p75 = scmp.ne.s32.totalorder %s67, %s69
    %p76 = scmp.eq.s32.totalorder %s17, 1
    %p77 = por %p75, %p76
    %p78 = scmp.ne.s32.totalorder %s69, %s70
    %p79 = scmp.eq.s32.totalorder %s17, 0
    %p80 = por %p78, %p79
    %p81 = scmp.ne.s32.totalorder %s69, %s70
    %p82 = scmp.eq.s32.totalorder %s18, 1
    %p83 = por %p81, %p82
    %p85 = scmp.ne.s32.totalorder %s70, %s84
    %p86 = scmp.eq.s32.totalorder %s18, 0
    %p87 = por %p85, %p86
    %s89 = sadd.s32 %s88, 1
    %p92 = scmp.eq.s32.totalorder %s12, 1
    %p93 = scmp.ne.s32.totalorder %s88, %s90
    %p94 = scmp.eq.s32.totalorder %s12, 0
    %p95 = por %p93, %p94
    %p96 = scmp.ne.s32.totalorder %s88, %s90
    %p97 = scmp.eq.s32.totalorder %s17, 1
    %p98 = por %p96, %p97
    %p99 = scmp.ne.s32.totalorder %s90, %s91
    %p100 = scmp.eq.s32.totalorder %s17, 0
    %p101 = por %p99, %p100
    %p102 = scmp.ne.s32.totalorder %s90, %s91
    %p103 = scmp.eq.s32.totalorder %s18, 1
    %p104 = por %p102, %p103
    %p106 = scmp.ne.s32.totalorder %s91, %s105
    %p107 = scmp.eq.s32.totalorder %s18, 0
    %p108 = por %p106, %p107
    %s110 = sadd.s32 %s109, 1
    %p113 = scmp.eq.s32.totalorder %s12, 1
    %p114 = scmp.ne.s32.totalorder %s109, %s111
    %p115 = scmp.eq.s32.totalorder %s12, 0
    %p116 = por %p114, %p115
    %p117 = scmp.ne.s32.totalorder %s109, %s111
    %p118 = scmp.eq.s32.totalorder %s17, 1
    %p119 = por %p117, %p118
    %p120 = scmp.ne.s32.totalorder %s111, %s112
    %p121 = scmp.eq.s32.totalorder %s17, 0
    %p122 = por %p120, %p121
    %p123 = scmp.ne.s32.totalorder %s111, %s112
    %p124 = scmp.eq.s32.totalorder %s18, 1
    %p125 = por %p123, %p124
    %p127 = scmp.ne.s32.totalorder %s112, %s126
    %p128 = scmp.eq.s32.totalorder %s18, 0
    %p129 = por %p127, %p128
    %s131 = sadd.s32 %s130, 1
    %p134 = scmp.eq.s32.totalorder %s12, 1
    %p135 = scmp.ne.s32.totalorder %s130, %s132
    %p136 = scmp.eq.s32.totalorder %s12, 0
    %p137 = por %p135, %p136
    %p138 = scmp.ne.s32.totalorder %s130, %s132
    %p139 = scmp.eq.s32.totalorder %s17, 1
    %p140 = por %p138, %p139
    %p141 = scmp.ne.s32.totalorder %s132, %s133
    %p142 = scmp.eq.s32.totalorder %s17, 0
    %p143 = por %p141, %p142
    %p144 = scmp.ne.s32.totalorder %s132, %s133
    %p145 = scmp.eq.s32.totalorder %s18, 1
    %p146 = por %p144, %p145
    %p148 = scmp.ne.s32.totalorder %s133, %s147
    %p149 = scmp.eq.s32.totalorder %s18, 0
    %p150 = por %p148, %p149
    %s151 = ssub.s32 %s12, %s19
    %p152 = scmp.eq.s32.totalorder %s151, 0
    %s154 = sadd.s32 %s153, 1
    %s155 = scalar_select %p152, %s153, %s154
    %p158 = pneg %p152
    %p159 = scmp.eq.s32.totalorder %s12, 1
    %p160 = por %p158, %p159
    %p161 = scmp.ne.s32.totalorder %s153, %s156
    %p162 = scmp.eq.s32.totalorder %s12, 0
    %p163 = por %p161, %p162
    %p164 = scmp.ne.s32.totalorder %s153, %s156
    %p165 = scmp.eq.s32.totalorder %s17, 1
    %p166 = por %p164, %p165
    %p167 = scmp.ne.s32.totalorder %s156, %s157
    %p168 = scmp.eq.s32.totalorder %s17, 0
    %p169 = por %p167, %p168
    %p170 = scmp.ne.s32.totalorder %s156, %s157
    %p171 = scmp.eq.s32.totalorder %s18, 1
    %p172 = por %p170, %p171
    %p174 = scmp.ne.s32.totalorder %s157, %s173
    %p175 = scmp.eq.s32.totalorder %s18, 0
    %p176 = por %p174, %p175
    %p177 = scmp.le.s32.totalorder 1, %s12
    %p178 = scmp.lt.s32.totalorder %s12, 3
    %p179 = pnand %p177, %p178
    %p180 = pneg %p179
    // Predicated region
    $region9: #{unet_conv_forward.1} parent=5 // pred_check
      _
    $region10: #{unet_conv_forward.1} parent=5 // pred_check_branch
      %182 = sbr.rel (%p179) target = $region12
    $region11: #{unet_conv_forward.1} parent=5 // pred_region
      %s183 = ssub.s32 %s12, 1
      // Predicated region
      $region13: #{unet_conv_forward.1} parent=11 // pred_check
        %p184 = pneg %p59
      $region14: #{unet_conv_forward.1} parent=11 // pred_check_branch
        %186 = sbr.rel (%p184) target = $region16
      $region15: #{unet_conv_forward.1} parent=11 // pred_region
        _
      $region16: #{unet_conv_forward.1} parent=11 // pred_fallthru
        _
      // Predicated region
      $region17: #{unet_conv_forward.1} parent=11 // pred_check
        %p187 = pneg %p80
      $region18: #{unet_conv_forward.1} parent=11 // pred_check_branch
        %189 = sbr.rel (%p187) target = $region20
      $region19: #{unet_conv_forward.1} parent=11 // pred_region
        _
      $region20: #{unet_conv_forward.1} parent=11 // pred_fallthru
        _
      // Predicated region
      $region21: #{unet_conv_forward.1} parent=11 // pred_check
        %p190 = pneg %p101
      $region22: #{unet_conv_forward.1} parent=11 // pred_check_branch
        %192 = sbr.rel (%p190) target = $region24
      $region23: #{unet_conv_forward.1} parent=11 // pred_region
        _
      $region24: #{unet_conv_forward.1} parent=11 // pred_fallthru
        _
      // Predicated region
      $region25: #{unet_conv_forward.1} parent=11 // pred_check
        %p193 = pneg %p122
      $region26: #{unet_conv_forward.1} parent=11 // pred_check_branch
        %195 = sbr.rel (%p193) target = $region28
      $region27: #{unet_conv_forward.1} parent=11 // pred_region
        _
      $region28: #{unet_conv_forward.1} parent=11 // pred_fallthru
        _
      // Predicated region
      $region29: #{unet_conv_forward.1} parent=11 // pred_check
        %p196 = pneg %p143
      $region30: #{unet_conv_forward.1} parent=11 // pred_check_branch
        %198 = sbr.rel (%p196) target = $region32
      $region31: #{unet_conv_forward.1} parent=11 // pred_region
        _
      $region32: #{unet_conv_forward.1} parent=11 // pred_fallthru
        _
    $region12: #{unet_conv_forward.1} parent=5 // pred_fallthru
      _
    %p199 = scmp.lt.s32.totalorder %s12, 2
    // Predicated region
    $region33: #{unet_conv_forward.1} parent=5 // pred_check
      %p200 = pneg %p199
    $region34: #{unet_conv_forward.1} parent=5 // pred_check_branch
      %202 = sbr.rel (%p200) target = $region36
    $region35: #{unet_conv_forward.1} parent=5 // pred_region
      // Predicated region
      $region37: #{unet_conv_forward.1} parent=35 // pred_check
        %p203 = pneg %p32
      $region38: #{unet_conv_forward.1} parent=35 // pred_check_branch
        %205 = sbr.rel (%p203) target = $region40
      $region39: #{unet_conv_forward.1} parent=35 // pred_region
        %p206 = scmp.lt.s32.totalorder %s12, 1
        %s207 = scalar_select %p206, %s12, 1
        %s208 = smul.addr %s207, 4
        %s209 = smul.addr %s208, 8
        %s210 = scalar_lea.vmem %s0, %s209
      $region40: #{unet_conv_forward.1} parent=35 // pred_fallthru
        _
    $region36: #{unet_conv_forward.1} parent=5 // pred_fallthru
      _
    %p211 = scmp.le.s32.totalorder 1, %s12
    %p212 = scmp.lt.s32.totalorder %s12, 3
    %p213 = pnand %p211, %p212
    %p214 = pneg %p213
    // Predicated region
    $region41: #{unet_conv_forward.1} parent=5 // pred_check
      _
    $region42: #{unet_conv_forward.1} parent=5 // pred_check_branch
      %216 = sbr.rel (%p213) target = $region44
    $region43: #{unet_conv_forward.1} parent=5 // pred_region
      %s217 = ssub.s32 %s12, 1
      %p218 = scmp.lt.s32.totalorder %s17, 1
      %s219 = scalar_select %p218, %s17, 1
      %s220 = smul.addr %s219, 4
      %s221 = smul.addr %s220, 8
      %s222 = scalar_lea.vmem %s0, %s221
      %p223 = pneg %p38
      %p224 = pneg %p35
      %p225 = pneg %p59
      %p226 = pneg %p56
      %p227 = pneg %p80
      %p228 = pneg %p77
      %p229 = pneg %p101
      %p230 = pneg %p98
      %p231 = pneg %p122
      %p232 = pneg %p119
      %p233 = pneg %p143
      %p234 = pneg %p140
      %p235 = pneg %p169
      %p236 = pneg %p166
      %p237 = scmp.lt.s32.totalorder %s17, 1
      %s238 = scalar_select %p237, %s17, 1
      %s239 = smul.addr %s238, 8
      %s240 = scalar_lea.vmem %s6, %s239
      %p241 = scmp.lt.s32.totalorder %s17, 1
      %s242 = scalar_select %p241, %s17, 1
      %s243 = smul.addr %s242, 4
      %s244 = smul.addr %s243, 8
      %s245 = scalar_lea.vmem %s0, %s244
      %p246 = scmp.lt.s32.totalorder %s17, 1
      %s247 = scalar_select %p246, %s17, 1
      %s248 = smul.addr %s247, 8
      %s249 = scalar_lea.vmem %s6, %s248
      %v250 = vld [vmem:[%s245] sm:$0xff]
      %vm251 = vcmask 654336
      %252 = vst.msk [vmem:[#allocation2] sm:$0xff] %vm251, %v250
      %s253 = scalar_lea.vmem %s245, 8
      %v254 = vld [vmem:[%s253] sm:$0xff]
      %255 = vst.msk [vmem:[#allocation2 + $0x8] sm:$0xff] %vm251, %v254
      %v256 = vld [vmem:[%s245] sm:$0xff]
      %258 = vrot.lane.b32.xlu0 %v256, 127
      %v259 = vpop.permute.xlu0 %258
      %261 = vst.msk [vmem:[#allocation2 + $0x10] sm:$0xff] %vm251, %v259
      %s262 = scalar_lea.vmem %s245, 16
      %v263 = vld [vmem:[%s262] sm:$0xff]
      %264 = vst.msk [vmem:[#allocation2 + $0x18] sm:$0xff] %vm251, %v263
      %s265 = scalar_lea.vmem %s245, 24
      %v266 = vld [vmem:[%s265] sm:$0xff]
      %267 = vst.msk [vmem:[#allocation2 + $0x20] sm:$0xff] %vm251, %v266
      %v268 = vld [vmem:[%s262] sm:$0xff]
      %270 = vrot.lane.b32.xlu0 %v268, 127
      %v271 = vpop.permute.xlu0 %270
      %273 = vst.msk [vmem:[#allocation2 + $0x28] sm:$0xff] %vm251, %v271
      %v274 = vld [vmem:[%s245] sm:$0xff]
      %276 = vrot.lane.b32.xlu0 %v274, 118
      %v277 = vpop.permute.xlu0 %276
      %279 = vst.msk [vmem:[#allocation2 + $0x30] sm:$0xff] %vm251, %v277
      %v280 = vld [vmem:[%s253] sm:$0xff]
      %282 = vrot.lane.b32.xlu0 %v280, 118
      %v283 = vpop.permute.xlu0 %282
      %285 = vst.msk [vmem:[#allocation2 + $0x38] sm:$0xff] %vm251, %v283
      %v286 = vld [vmem:[%s245] sm:$0xff]
      %288 = vrot.lane.b32.xlu0 %v286, 117
      %v289 = vpop.permute.xlu0 %288
      %291 = vst.msk [vmem:[#allocation2 + $0x40] sm:$0xff] %vm251, %v289
      %v292 = vld [vmem:[%s1] sm:$0xff]
      %v293 = vld [vmem:[#allocation2] sm:$0xff]
      %v294 = vld [vmem:[#allocation2 + $0x8] sm:$0xff]
      %v295 = vld [vmem:[#allocation2 + $0x10] sm:$0xff]
      %v296 = vld [vmem:[#allocation2 + $0x18] sm:$0xff]
      %v297 = vld [vmem:[#allocation2 + $0x20] sm:$0xff]
      %v298 = vld [vmem:[#allocation2 + $0x28] sm:$0xff]
      %v299 = vld [vmem:[#allocation2 + $0x30] sm:$0xff]
      %v300 = vld [vmem:[#allocation2 + $0x38] sm:$0xff]
      %v301 = vld [vmem:[#allocation2 + $0x40] sm:$0xff]
      %v302 = vld [vmem:[%s2] sm:$0xff]
      %304 = vset.pattern.permute.xlu0 0
      %305 = vperm.xlu0 %304, %v302
      %v306 = vpop.permute.xlu0 %305
      %vm308 = vcmask 588800
      %v310 = vsel %vm308, %v292, 0
      %312 = vmatprep.subr.mxu0 0.0
      %313 = vmatpush1.msra.mxu0 %v293
      %314 = vmatprep.subr.mxu0 0.0
      %315 = vmatpush1.msra.mxu0 %v294
      %316 = vmatprep.subr.mxu0 0.0
      %317 = vmatpush1.msra.mxu0 %v295
      %318 = vmatprep.subr.mxu0 0.0
      %319 = vmatpush1.msra.mxu0 %v296
      %320 = vmatprep.subr.mxu0 0.0
      %321 = vmatpush1.msra.mxu0 %v297
      %322 = vmatprep.subr.mxu0 0.0
      %323 = vmatpush1.msra.mxu0 %v298
      %324 = vmatprep.subr.mxu0 0.0
      %325 = vmatpush1.msra.mxu0 %v299
      %326 = vmatprep.subr.mxu0 0.0
      %327 = vmatpush1.msra.mxu0 %v300
      %328 = vmatprep.subr.mxu0 0.0
      %329 = vmatpush1.msra.mxu0 %v301
      %330 = vmatprep.subr.mxu0 0.0
      %331 = vmatpush1.msra.mxu0 0.0
      %332 = vmatprep.subr.mxu0 0.0
      %333 = vmatpush1.msra.mxu0 0.0
      %334 = vmatprep.subr.mxu0 0.0
      %335 = vmatpush1.msra.mxu0 0.0
      %336 = vmatprep.subr.mxu0 0.0
      %337 = vmatpush1.msra.mxu0 0.0
      %338 = vmatprep.subr.mxu0 0.0
      %339 = vmatpush1.msra.mxu0 0.0
      %340 = vmatprep.subr.mxu0 0.0
      %341 = vmatpush1.msra.mxu0 0.0
      %342 = vmatprep.subr.mxu0 0.0
      %343 = vmatpush1.msra.mxu0 0.0
      %344 = vmatprep.subr.mxu0 0.0
      %345 = vmatpush1.msra.mxu0 0.0
      %346 = vmatprep.subr.mxu0 0.0
      %347 = vmatpush1.msra.mxu0 0.0
      %348 = vmatprep.subr.mxu0 0.0
      %349 = vmatpush1.msra.mxu0 0.0
      %350 = vmatprep.subr.mxu0 0.0
      %351 = vmatpush1.msra.mxu0 0.0
      %352 = vmatprep.subr.mxu0 0.0
      %353 = vmatpush1.msra.mxu0 0.0
      %354 = vmatprep.subr.mxu0 0.0
      %355 = vmatpush1.msra.mxu0 0.0
      %356 = vmatprep.subr.mxu0 0.0
      %357 = vmatpush1.msra.mxu0 0.0
      %358 = vmatprep.subr.mxu0 0.0
      %359 = vmatpush1.msra.mxu0 0.0
      %360 = vmatprep.subr.mxu0 0.0
      %361 = vmatpush1.msra.mxu0 0.0
      %362 = vmatprep.subr.mxu0 0.0
      %363 = vmatpush1.msra.mxu0 0.0
      %364 = vmatprep.subr.mxu0 0.0
      %365 = vmatpush1.msra.mxu0 0.0
      %366 = vmatprep.subr.mxu0 0.0
      %367 = vmatpush1.msra.mxu0 0.0
      %368 = vmatprep.subr.mxu0 0.0
      %369 = vmatpush1.msra.mxu0 0.0
      %370 = vmatprep.subr.mxu0 0.0
      %371 = vmatpush1.msra.mxu0 0.0
      %372 = vmatprep.subr.mxu0 0.0
      %373 = vmatpush1.msra.mxu0 0.0
      %374 = vmatprep.subr.mxu0 0.0
      %375 = vmatpush1.msra.mxu0 0.0
      %376 = vmatprep.mubr.f32.mxu0 0.0
      %377 = vmatmul.mubr.f32.gmra.mrb[0].mxu0 %v310
      %v378 = vpop.f32.mrb[0].mxu0
      %v379 = vadd.f32 %v306, %v378
      %v380 = vpop.f32.mrb[0].mxu0
      %381 = vdwg.mxu0
      %v382 = vmax.f32 %v379, 0.0
      %v383 = vld [vmem:[%s5] sm:$0x1]
      %v385 = vlaneseq
      %v386 = vshrl.u32 %v385, 7
      %v387 = vsub.s32 0, %v386
      %v388 = vrot.slane %v383, %v387
      %v390 = vmul.f32 %v382, %v388
      %vm391 = vcmask 89088
      %392 = vst.msk [vmem:[#allocation3] sm:$0xff] %vm391, 0.0
      %vm393 = vcmask 835288
      %394 = vst.msk [vmem:[#allocation3] sm:$0xff] %vm393, 0.0
      %396 = vrot.lane.b32.xlu0 %v390, 11
      %v397 = vpop.permute.xlu0 %396
      %vm399 = vcmask 744536
      %400 = vst.msk [vmem:[#allocation3] sm:$0xff] %vm399, %v397
      %v401 = vld [vmem:[#allocation3] sm:$0xff]
      %402 = vst.msk [vmem:[#allocation4] sm:$0xff] %vm251, %v401
      %v403 = vld [vmem:[#allocation3] sm:$0xff]
      %405 = vrot.lane.b32.xlu0 %v403, 127
      %v406 = vpop.permute.xlu0 %405
      %408 = vst.msk [vmem:[#allocation4 + $0x8] sm:$0xff] %vm251, %v406
      %v409 = vld [vmem:[#allocation3] sm:$0xff]
      %411 = vrot.lane.b32.xlu0 %v409, 126
      %v412 = vpop.permute.xlu0 %411
      %414 = vst.msk [vmem:[#allocation4 + $0x10] sm:$0xff] %vm251, %v412
      %v415 = vld [vmem:[#allocation3] sm:$0xff]
      %417 = vrot.lane.b32.xlu0 %v415, 118
      %v418 = vpop.permute.xlu0 %417
      %420 = vst.msk [vmem:[#allocation4 + $0x18] sm:$0xff] %vm251, %v418
      %v421 = vld [vmem:[#allocation3] sm:$0xff]
      %423 = vrot.lane.b32.xlu0 %v421, 117
      %v424 = vpop.permute.xlu0 %423
      %426 = vst.msk [vmem:[#allocation4 + $0x20] sm:$0xff] %vm251, %v424
      %v427 = vld [vmem:[#allocation3] sm:$0xff]
      %429 = vrot.lane.b32.xlu0 %v427, 116
      %v430 = vpop.permute.xlu0 %429
      %432 = vst.msk [vmem:[#allocation4 + $0x28] sm:$0xff] %vm251, %v430
      %v433 = vld [vmem:[#allocation3] sm:$0xff]
      %435 = vrot.lane.b32.xlu0 %v433, 108
      %v436 = vpop.permute.xlu0 %435
      %438 = vst.msk [vmem:[#allocation4 + $0x30] sm:$0xff] %vm251, %v436
      %v439 = vld [vmem:[#allocation3] sm:$0xff]
      %441 = vrot.lane.b32.xlu0 %v439, 107
      %v442 = vpop.permute.xlu0 %441
      %444 = vst.msk [vmem:[#allocation4 + $0x38] sm:$0xff] %vm251, %v442
      %v445 = vld [vmem:[#allocation3] sm:$0xff]
      %447 = vrot.lane.b32.xlu0 %v445, 106
      %v448 = vpop.permute.xlu0 %447
      %450 = vst.msk [vmem:[#allocation4 + $0x40] sm:$0xff] %vm251, %v448
      %v451 = vld [vmem:[%s3] sm:$0xff]
      %v452 = vld [vmem:[#allocation4] sm:$0xff]
      %v453 = vld [vmem:[#allocation4 + $0x8] sm:$0xff]
      %v454 = vld [vmem:[#allocation4 + $0x10] sm:$0xff]
      %v455 = vld [vmem:[#allocation4 + $0x18] sm:$0xff]
      %v456 = vld [vmem:[#allocation4 + $0x20] sm:$0xff]
      %v457 = vld [vmem:[#allocation4 + $0x28] sm:$0xff]
      %v458 = vld [vmem:[#allocation4 + $0x30] sm:$0xff]
      %v459 = vld [vmem:[#allocation4 + $0x38] sm:$0xff]
      %v460 = vld [vmem:[#allocation4 + $0x40] sm:$0xff]
      %v461 = vld [vmem:[%s4] sm:$0xff]
      %463 = vset.pattern.permute.xlu0 0
      %464 = vperm.xlu0 %463, %v461
      %v465 = vpop.permute.xlu0 %464
      %v468 = vsel %vm308, %v451, 0
      %470 = vmatprep.subr.mxu0 0.0
      %471 = vmatpush1.msra.mxu0 %v452
      %472 = vmatprep.subr.mxu0 0.0
      %473 = vmatpush1.msra.mxu0 %v453
      %474 = vmatprep.subr.mxu0 0.0
      %475 = vmatpush1.msra.mxu0 %v454
      %476 = vmatprep.subr.mxu0 0.0
      %477 = vmatpush1.msra.mxu0 %v455
      %478 = vmatprep.subr.mxu0 0.0
      %479 = vmatpush1.msra.mxu0 %v456
      %480 = vmatprep.subr.mxu0 0.0
      %481 = vmatpush1.msra.mxu0 %v457
      %482 = vmatprep.subr.mxu0 0.0
      %483 = vmatpush1.msra.mxu0 %v458
      %484 = vmatprep.subr.mxu0 0.0
      %485 = vmatpush1.msra.mxu0 %v459
      %486 = vmatprep.subr.mxu0 0.0
      %487 = vmatpush1.msra.mxu0 %v460
      %488 = vmatprep.subr.mxu0 0.0
      %489 = vmatpush1.msra.mxu0 0.0
      %490 = vmatprep.subr.mxu0 0.0
      %491 = vmatpush1.msra.mxu0 0.0
      %492 = vmatprep.subr.mxu0 0.0
      %493 = vmatpush1.msra.mxu0 0.0
      %494 = vmatprep.subr.mxu0 0.0
      %495 = vmatpush1.msra.mxu0 0.0
      %496 = vmatprep.subr.mxu0 0.0
      %497 = vmatpush1.msra.mxu0 0.0
      %498 = vmatprep.subr.mxu0 0.0
      %499 = vmatpush1.msra.mxu0 0.0
      %500 = vmatprep.subr.mxu0 0.0
      %501 = vmatpush1.msra.mxu0 0.0
      %502 = vmatprep.subr.mxu0 0.0
      %503 = vmatpush1.msra.mxu0 0.0
      %504 = vmatprep.subr.mxu0 0.0
      %505 = vmatpush1.msra.mxu0 0.0
      %506 = vmatprep.subr.mxu0 0.0
      %507 = vmatpush1.msra.mxu0 0.0
      %508 = vmatprep.subr.mxu0 0.0
      %509 = vmatpush1.msra.mxu0 0.0
      %510 = vmatprep.subr.mxu0 0.0
      %511 = vmatpush1.msra.mxu0 0.0
      %512 = vmatprep.subr.mxu0 0.0
      %513 = vmatpush1.msra.mxu0 0.0
      %514 = vmatprep.subr.mxu0 0.0
      %515 = vmatpush1.msra.mxu0 0.0
      %516 = vmatprep.subr.mxu0 0.0
      %517 = vmatpush1.msra.mxu0 0.0
      %518 = vmatprep.subr.mxu0 0.0
      %519 = vmatpush1.msra.mxu0 0.0
      %520 = vmatprep.subr.mxu0 0.0
      %521 = vmatpush1.msra.mxu0 0.0
      %522 = vmatprep.subr.mxu0 0.0
      %523 = vmatpush1.msra.mxu0 0.0
      %524 = vmatprep.subr.mxu0 0.0
      %525 = vmatpush1.msra.mxu0 0.0
      %526 = vmatprep.subr.mxu0 0.0
      %527 = vmatpush1.msra.mxu0 0.0
      %528 = vmatprep.subr.mxu0 0.0
      %529 = vmatpush1.msra.mxu0 0.0
      %530 = vmatprep.subr.mxu0 0.0
      %531 = vmatpush1.msra.mxu0 0.0
      %532 = vmatprep.subr.mxu0 0.0
      %533 = vmatpush1.msra.mxu0 0.0
      %534 = vmatprep.mubr.f32.mxu0 0.0
      %535 = vmatmul.mubr.f32.gmra.mrb[0].mxu0 %v468
      %v536 = vpop.f32.mrb[0].mxu0
      %v537 = vadd.f32 %v465, %v536
      %v538 = vpop.f32.mrb[0].mxu0
      %539 = vdwg.mxu0
      %v540 = vmax.f32 %v537, 0.0
      %541 = vst.msk [vmem:[%s249] sm:$0xff] %vm251, %v540
      %p542 = scmp.lt.s32.totalorder %s17, 1
      %s543 = scalar_select %p542, %s17, 1
      %s544 = smul.addr %s543, 8
      %s545 = scalar_lea.vmem %s6, %s544
      // Predicated region
      $region45: #{unet_conv_forward.1} parent=43 // pred_check
        %p546 = pneg %p166
      $region46: #{unet_conv_forward.1} parent=43 // pred_check_branch
        %548 = sbr.rel (%p546) target = $region48
      $region47: #{unet_conv_forward.1} parent=43 // pred_region
        _
      $region48: #{unet_conv_forward.1} parent=43 // pred_fallthru
        _
    $region44: #{unet_conv_forward.1} parent=5 // pred_fallthru
      _
    %p549 = scmp.le.s32.totalorder 2, %s12
    // Predicated region
    $region49: #{unet_conv_forward.1} parent=5 // pred_check
      %p550 = pneg %p549
    $region50: #{unet_conv_forward.1} parent=5 // pred_check_branch
      %552 = sbr.rel (%p550) target = $region52
    $region51: #{unet_conv_forward.1} parent=5 // pred_region
      %s553 = ssub.s32 %s12, 2
      // Predicated region
      $region53: #{unet_conv_forward.1} parent=51 // pred_check
        %p554 = pneg %p172
      $region54: #{unet_conv_forward.1} parent=51 // pred_check_branch
        %556 = sbr.rel (%p554) target = $region56
      $region55: #{unet_conv_forward.1} parent=51 // pred_region
        %p557 = scmp.lt.s32.totalorder %s18, 1
        %s558 = scalar_select %p557, %s18, 1
        %s559 = smul.addr %s558, 8
        %s560 = scalar_lea.vmem %s6, %s559
      $region56: #{unet_conv_forward.1} parent=51 // pred_fallthru
        _
    $region52: #{unet_conv_forward.1} parent=5 // pred_fallthru
      _
  $region6: #{unet_conv_forward.1} parent=0 // loop_footer
    %s16 = sadd.s32 1, %s12
  $region7: #{unet_conv_forward.1} parent=0 // loop_footer_branch
    %11 = sbr.rel target = $region3
  $region8: #{unet_conv_forward.1} parent=0 // loop_exit
    _

</llo_original>
